<compile_context>
chip_gen: v7x
topology: tpu7x:2x2x1
jax: 0.10.0
libtpu: 0.0.40
codegen_flags: <defaults>
</compile_context>

<pallas_src>
import functools
import math

import jax
import jax.numpy as jnp
import numpy as np
from jax.experimental import pallas as pl
from jax.experimental.pallas import tpu as pltpu


def _rope_kernel(pos_ref, inv_ref, cos_ref, sin_ref, *, k, dim,
                 attention_scaling):
    # pos_ref: (TP, k)      f32 packed positions (k original rows per packed row)
    # inv_ref: (1, k*dim)   f32 tile(cat(inv_freq, inv_freq), k)
    # cos_ref/sin_ref: (TP, k*dim) output tiles (k*dim % 128 == 0 -> dense vst)
    tp = pos_ref.shape[0]
    kd = cos_ref.shape[1]                       # k * dim
    p = pos_ref[...]                            # (TP, k)

    # Exact in-register expansion: pos_full[:, l] = p[:, l // dim].
    # Lane-broadcasts + selects on compile-time masks; no MXU, no precision
    # hazard, and the VPU work is hidden under the output DMA.
    lane = jax.lax.broadcasted_iota(jnp.int32, (tp, kd), 1)
    pos_full = jnp.broadcast_to(p[:, 0:1], (tp, kd))
    for j in range(1, k):
        pj = jnp.broadcast_to(p[:, j:j + 1], (tp, kd))
        pos_full = jnp.where(lane >= j * dim, pj, pos_full)

    # inv_full already encodes the cat(freqs, freqs) duplication, so a single
    # full-width cos/sin produces the final packed rows directly.
    freqs = pos_full * inv_ref[...]             # (TP, kd) * (1, kd)
    c = jnp.cos(freqs)                          # EUP, lane-dense
    s = jnp.sin(freqs)
    if attention_scaling != 1.0:                # statically skipped for default rope
        c = c * attention_scaling
        s = s * attention_scaling
    cos_ref[...] = c.astype(cos_ref.dtype)      # one dense store per output
    sin_ref[...] = s.astype(sin_ref.dtype)


def llama_rotary_embedding(x, position_ids, *, dim, base=10000.0,
                           scaling_factor=1.0, attention_scaling=1.0):
    """Pallas implementation of LlamaRotaryEmbedding.forward (rope_type='default').

    x:            any array; only x.dtype is used (matches the PyTorch forward).
    position_ids: int array [B, S].
    Returns (cos, sin), each [B, S, dim] in x.dtype.
    """
    del scaling_factor                      # 'default' rope ignores the factor
    assert dim % 2 == 0, "rotary dim must be even"
    B, S = position_ids.shape
    half = dim // 2
    out_dtype = x.dtype
    itemsize = np.dtype(out_dtype).itemsize

    # Lane packing: k original rows per packed output row so the output minor
    # dim k*dim is a multiple of 128 (lane-dense vregs, unmasked HBM stores).
    k = 128 // math.gcd(half, 128)
    kd = k * dim

    N = B * S
    n_pad = pl.cdiv(N, k) * k               # pad only to a multiple of k
    np_rows = n_pad // k                    # packed rows

    pos_flat = position_ids.reshape(N).astype(jnp.float32)
    if n_pad != N:
        pos_flat = jnp.pad(pos_flat, (0, n_pad - N))
    pos_packed = pos_flat.reshape(np_rows, k)

    # inv_freq exactly as the module __init__ ('default' rope); the kernel's
    # frequency table is cat(inv, inv) tiled k times, so the cat(freqs, freqs)
    # duplication needs no data movement in the kernel.
    inv = (np.float32(1.0) /
           (np.float32(base) ** (np.arange(0, dim, 2, dtype=np.float32)
                                 / np.float32(dim))))
    inv_full = jnp.asarray(np.tile(np.concatenate([inv, inv]), k)
                           .reshape(1, kd).astype(np.float32))

    # Row tile: sized so one full-width f32 temporary is ~2 MiB per step
    # (=> ~4096-8192 original rows/step, 2-4 MiB HBM writeback/step), aligned
    # to the output dtype's sublane tile (8 for f32, 16 for bf16/fp16).
    sub = 8 if itemsize >= 4 else (16 if itemsize == 2 else 32)
    blk_budget = 2 * 1024 * 1024
    tp = max(sub, (blk_budget // (kd * 4)) // sub * sub)
    if tp >= np_rows:
        tp = np_rows                        # single full-extent block
    grid = (pl.cdiv(np_rows, tp),)

    kernel = functools.partial(_rope_kernel, k=k, dim=dim,
                               attention_scaling=float(attention_scaling))

    out_shape = (
        jax.ShapeDtypeStruct((np_rows, kd), out_dtype),
        jax.ShapeDtypeStruct((np_rows, kd), out_dtype),
    )

    cost = pl.CostEstimate(
        flops=int((k + 2) * n_pad * dim),              # selects + mul + cast
        transcendentals=int(2 * n_pad * dim),          # full-width cos + sin
        bytes_accessed=int(4 * (pos_packed.size + inv_full.size)
                           + 2 * n_pad * dim * itemsize),
    )

    grid_spec = pltpu.PrefetchScalarGridSpec(
        num_scalar_prefetch=0,
        grid=grid,
        in_specs=[
            pl.BlockSpec((tp, k), lambda i: (i, 0)),       # packed positions
            pl.BlockSpec((1, kd), lambda i: (0, 0)),       # duplicated inv_freq
        ],
        out_specs=[
            pl.BlockSpec((tp, kd), lambda i: (i, 0)),
            pl.BlockSpec((tp, kd), lambda i: (i, 0)),
        ],
    )

    cos_p, sin_p = pl.pallas_call(
        kernel,
        out_shape=out_shape,
        grid_spec=grid_spec,
        cost_estimate=cost,
        compiler_params=pltpu.CompilerParams(
            dimension_semantics=("parallel",),
            vmem_limit_bytes=32 * 1024 * 1024),
    )(pos_packed, inv_full)

    # Pure layout plumbing: (np_rows, k*dim) is row-major identical to
    # (n_pad, dim). The [:N] slice (extra HBM pass) only happens for a ragged
    # tail, i.e. when B*S is not a multiple of k.
    cos = cos_p.reshape(n_pad, dim)
    sin = sin_p.reshape(n_pad, dim)
    if n_pad != N:
        cos = cos[:N]
        sin = sin[:N]
    return cos.reshape(B, S, dim), sin.reshape(B, S, dim)


def _reference(x, position_ids, *, dim, base=10000.0, attention_scaling=1.0):
    inv = 1.0 / (base ** (jnp.arange(0, dim, 2, dtype=jnp.float32) / dim))
    freqs = position_ids.astype(jnp.float32)[:, :, None] * inv[None, None, :]
    emb = jnp.concatenate([freqs, freqs], axis=-1)
    cos = (jnp.cos(emb) * attention_scaling).astype(x.dtype)
    sin = (jnp.sin(emb) * attention_scaling).astype(x.dtype)
    return cos, sin


if __name__ == "__main__":
    key = jax.random.PRNGKey(0)

    # (B, S, H, D, dtype, pos_offset, tol): packing factors, ragged tail,
    # large positions (exercises the removed bf16/MXU truncation hazard) and
    # the 16-bit output path.
    configs = [
        (2, 16, 4, 64,  jnp.float32,  0,    2e-5),  # k=4 packing, no padding
        (1, 12, 2, 128, jnp.float32,  0,    2e-5),  # k=2 packing (Llama head_dim)
        (1, 5,  2, 32,  jnp.float32,  0,    2e-5),  # k=8 packing, ragged tail
        (1, 8,  2, 128, jnp.float32,  1000, 1e-3),  # large positions stay exact
        (2, 16, 4, 64,  jnp.bfloat16, 0,    8e-3),  # bf16 output dtype path
    ]
    for (B, S, H, D, dt, off, tol) in configs:
        kx, key = jax.random.split(key)
        # x only supplies the output dtype (as in the PyTorch forward).
        x = jax.random.normal(kx, (B, H, S, D), dtype=jnp.float32).astype(dt)
        position_ids = jnp.broadcast_to(
            jnp.arange(S, dtype=jnp.int32) + off, (B, S))

        cos, sin = llama_rotary_embedding(x, position_ids, dim=D)
        jax.block_until_ready((cos, sin))

        cos_ref, sin_ref = _reference(x, position_ids, dim=D)
        assert cos.shape == (B, S, D) and sin.shape == (B, S, D), (B, S, H, D)
        assert cos.dtype == x.dtype and sin.dtype == x.dtype, (B, S, H, D)
        assert jnp.allclose(cos.astype(jnp.float32), cos_ref.astype(jnp.float32),
                            atol=tol, rtol=tol), (B, S, H, D, dt)
        assert jnp.allclose(sin.astype(jnp.float32), sin_ref.astype(jnp.float32),
                            atol=tol, rtol=tol), (B, S, H, D, dt)

    print("KERNEL_OK")
</pallas_src>

<mosaic_0001>
module attributes {stable_mosaic.version = 11 : i64} {
  func.func @_rope_kernel(%arg0: i32, %arg1: memref<8x4xf32, #tpu.memory_space<vmem>>, %arg2: memref<1x256xf32, #tpu.memory_space<vmem>>, %arg3: memref<8x256xf32, #tpu.memory_space<vmem>>, %arg4: memref<8x256xf32, #tpu.memory_space<vmem>>) attributes {dimension_semantics = [#tpu.dimension_semantics<parallel>], iteration_bounds = array<i64: 1>, scalar_prefetch = 0 : i64, scratch_operands = 0 : i64, tpu.core_type = #tpu.core_type<tc>, window_params = [{transform_indices = @transform_0, window_bounds = array<i64: 8, 4>}, {pipeline_mode = #tpu.pipeline_mode<synchronous>, transform_indices = @transform_1, window_bounds = array<i64: 1, 256>}, {transform_indices = @transform_2, window_bounds = array<i64: 8, 256>}, {transform_indices = @transform_3, window_bounds = array<i64: 8, 256>}]} {
    %c0 = arith.constant 0 : index
    %c0_0 = arith.constant 0 : index
    %0 = vector.load %arg1[%c0, %c0_0] : memref<8x4xf32, #tpu.memory_space<vmem>>, vector<8x4xf32>
    %1 = tpu.iota {dimensions = array<i32: 1>} : vector<8x256xi32>
    %2 = vector.extract_strided_slice %0 {offsets = [0, 0], sizes = [8, 1], strides = [1, 1]} : vector<8x4xf32> to vector<8x1xf32>
    %3 = vector.shape_cast %2 : vector<8x1xf32> to vector<8x1xf32>
    %4 = vector.broadcast %3 : vector<8x1xf32> to vector<8x256xf32>
    %5 = vector.extract_strided_slice %0 {offsets = [0, 1], sizes = [8, 1], strides = [1, 1]} : vector<8x4xf32> to vector<8x1xf32>
    %6 = vector.shape_cast %5 : vector<8x1xf32> to vector<8x1xf32>
    %7 = vector.broadcast %6 : vector<8x1xf32> to vector<8x256xf32>
    %c64_i32 = arith.constant 64 : i32
    %8 = vector.broadcast %c64_i32 : i32 to vector<8x256xi32>
    %9 = arith.cmpi sge, %1, %8 : vector<8x256xi32>
    %10 = arith.select %9, %7, %4 : vector<8x256xi1>, vector<8x256xf32>
    %11 = vector.extract_strided_slice %0 {offsets = [0, 2], sizes = [8, 1], strides = [1, 1]} : vector<8x4xf32> to vector<8x1xf32>
    %12 = vector.shape_cast %11 : vector<8x1xf32> to vector<8x1xf32>
    %13 = vector.broadcast %12 : vector<8x1xf32> to vector<8x256xf32>
    %c128_i32 = arith.constant 128 : i32
    %14 = vector.broadcast %c128_i32 : i32 to vector<8x256xi32>
    %15 = arith.cmpi sge, %1, %14 : vector<8x256xi32>
    %16 = arith.select %15, %13, %10 : vector<8x256xi1>, vector<8x256xf32>
    %17 = vector.extract_strided_slice %0 {offsets = [0, 3], sizes = [8, 1], strides = [1, 1]} : vector<8x4xf32> to vector<8x1xf32>
    %18 = vector.shape_cast %17 : vector<8x1xf32> to vector<8x1xf32>
    %19 = vector.broadcast %18 : vector<8x1xf32> to vector<8x256xf32>
    %c192_i32 = arith.constant 192 : i32
    %20 = vector.broadcast %c192_i32 : i32 to vector<8x256xi32>
    %21 = arith.cmpi sge, %1, %20 : vector<8x256xi32>
    %22 = arith.select %21, %19, %16 : vector<8x256xi1>, vector<8x256xf32>
    %c0_1 = arith.constant 0 : index
    %c0_2 = arith.constant 0 : index
    %23 = vector.load %arg2[%c0_1, %c0_2] : memref<1x256xf32, #tpu.memory_space<vmem>>, vector<1x256xf32>
    %24 = vector.broadcast %23 : vector<1x256xf32> to vector<8x256xf32>
    %25 = arith.mulf %22, %24 : vector<8x256xf32>
    %26 = math.cos %25 : vector<8x256xf32>
    %27 = math.sin %25 : vector<8x256xf32>
    %c0_3 = arith.constant 0 : index
    %c0_4 = arith.constant 0 : index
    %28 = vector.load %arg3[%c0_3, %c0_4] : memref<8x256xf32, #tpu.memory_space<vmem>>, vector<8x256xf32>
    tpu.vector_store %arg3[%c0_3, %c0_4], %26 {strides = array<i32>} : memref<8x256xf32, #tpu.memory_space<vmem>>, vector<8x256xf32>,
    %c0_5 = arith.constant 0 : index
    %c0_6 = arith.constant 0 : index
    %29 = vector.load %arg4[%c0_5, %c0_6] : memref<8x256xf32, #tpu.memory_space<vmem>>, vector<8x256xf32>
    tpu.vector_store %arg4[%c0_5, %c0_6], %27 {strides = array<i32>} : memref<8x256xf32, #tpu.memory_space<vmem>>, vector<8x256xf32>,
    return
  }
  func.func @transform_0(%arg0: i32) -> (i32, i32) {
    %c0_i32 = arith.constant 0 : i32
    %c0_i32_0 = arith.constant 0 : i32
    return %arg0, %c0_i32 : i32, i32
  }
  func.func @transform_1(%arg0: i32) -> (i32, i32) {
    %c0_i32 = arith.constant 0 : i32
    %c0_i32_0 = arith.constant 0 : i32
    %c0_i32_1 = arith.constant 0 : i32
    return %c0_i32, %c0_i32_0 : i32, i32
  }
  func.func @transform_2(%arg0: i32) -> (i32, i32) {
    %c0_i32 = arith.constant 0 : i32
    %c0_i32_0 = arith.constant 0 : i32
    return %arg0, %c0_i32 : i32, i32
  }
  func.func @transform_3(%arg0: i32) -> (i32, i32) {
    %c0_i32 = arith.constant 0 : i32
    %c0_i32_0 = arith.constant 0 : i32
    return %arg0, %c0_i32 : i32, i32
  }
}

</mosaic_0001>

<llo_original>
// kernel: tpu_custom_call.1
$region0: #{tpu_custom_call.1}
  #allocation0 [shape = 'u32[]', space=smem, size = 0x4, offset = 0x4, fixed_abs, tag = 'smem constant byte address 0x4 - core index']
  #allocation1 [shape = 'u32[144,128]{1,0:T(1,128)}', space=vmem, size = 0x12000, scoped, tag = 'internal scratch']
  %s0 = inlined_call_operand.vmem [shape: f32[8,4], index: 0, kind: input, shape index: {}]
  %s1 = inlined_call_operand.vmem [shape: f32[1,256], index: 1, kind: input, shape index: {}]
  %s2 = inlined_call_operand.hbm [shape: f32[8,256], index: 2, kind: output, shape index: {0}]
  %s3 = inlined_call_operand.hbm [shape: f32[8,256], index: 3, kind: output, shape index: {1}]
  %4 = xla_tuple %s2, %s3
  %s5 = sld [smem:[#allocation0]]
  $region26: #{tpu_custom_call.1} parent=0
    _
  %s7 = ssub.s32 1, %s5
  %s8 = scalar_select 0, %s7, %s5
  $region1: #{tpu_custom_call.1} parent=0
    #allocation2 [shape = 'u8[8192]{0}', space=vmem, size = 0x2000, scoped, tag = 'output window, operand 0, single buffered']
    #allocation3 [shape = 's32[1]{0}', space=sflag, size = 0x4, scoped, tag = 'scoped memory for tpu_custom_call.1']
    #allocation4 [shape = 'u8[8192]{0}', space=vmem, size = 0x2000, scoped, tag = 'output window, operand 1, single buffered']
    #allocation5 [shape = 's32[1]{0}', space=sflag, size = 0x4, scoped, tag = 'scoped memory for tpu_custom_call.1']
    %9 = vsyncpa [#allocation3], 0
    %10 = vsyncpa [#allocation5], 0
    // Predicated region
    $region2: #{tpu_custom_call.1} parent=1 // pred_check
      _
    $region3: #{tpu_custom_call.1} parent=1 // pred_check_branch
      %12 = sbr.rel (0) target = $region5
    $region4: #{tpu_custom_call.1} parent=1 // pred_region
      _
    $region5: #{tpu_custom_call.1} parent=1 // pred_fallthru
      _
    // Predicated region
    $region6: #{tpu_custom_call.1} parent=1 // pred_check
      _
    $region7: #{tpu_custom_call.1} parent=1 // pred_check_branch
      %14 = sbr.rel (0) target = $region9
    $region8: #{tpu_custom_call.1} parent=1 // pred_region
      _
    $region9: #{tpu_custom_call.1} parent=1 // pred_fallthru
      _
    %v15 = vld [vmem:[%s0] sm:$0xff]
    %v16 = vlaneseq
    %v17 = vand.u32 %v16, 127
    %v18 = vadd.s32 %v17, 128
    %20 = vset.pattern.permute.xlu0 0
    %21 = vperm.xlu0 %20, %v15
    %v22 = vpop.permute.xlu0 %21
    %24 = vset.pattern.permute.xlu0 1
    %25 = vperm.xlu0 %24, %v15
    %v26 = vpop.permute.xlu0 %25
    %vm28 = vcmp.ge.s32.totalorder %v17, 64
    %vm29 = vcmp.ge.s32.totalorder %v18, 64
    %v30 = vsel %vm28, %v26, %v22
    %v31 = vsel %vm29, %v26, %v22
    %32 = vset.pattern.permute.xlu0 2
    %33 = vperm.xlu0 %32, %v15
    %v34 = vpop.permute.xlu0 %33
    %vm36 = vcmp.ge.s32.totalorder %v17, 128
    %vm37 = vcmp.ge.s32.totalorder %v18, 128
    %v38 = vsel %vm36, %v34, %v30
    %v39 = vsel %vm37, %v34, %v31
    %40 = vset.pattern.permute.xlu0 3
    %41 = vperm.xlu0 %40, %v15
    %v42 = vpop.permute.xlu0 %41
    %vm44 = vcmp.ge.s32.totalorder %v17, 192
    %vm45 = vcmp.ge.s32.totalorder %v18, 192
    %v46 = vsel %vm44, %v42, %v38
    %v47 = vsel %vm45, %v42, %v39
    %v48 = vld [vmem:[%s1] sm:$0x3]
    %v50 = vlaneseq
    %v51 = vshrl.u32 %v50, 7
    %v52 = vsub.s32 0, %v51
    %v53 = vrot.slane %v48, %v52
    %v54 = vlaneseq
    %v55 = vshrl.u32 %v54, 7
    %v56 = vsub.s32 1, %v55
    %v57 = vrot.slane %v48, %v56
    %v60 = vmul.f32 %v46, %v53
    %v61 = vmul.f32 %v47, %v57
    %v62 = vand.u32 2147483647, %v60
    %vm63 = vcmp.le.f32.partialorder %v62, 0.7853982
    %vm64 = vcmp.lt.s32.totalorder %v60, 0
    %v65 = vand.u32 %v60, 2139095040
    %v66 = vshrl.u32 %v65, 23
    %v67 = vsub.s32 %v66, 127
    %v68 = vand.u32 2147483647, %v60
    %v69 = vand.u32 %v68, 8388607
    %v70 = vor.u32 %v69, 8388608
    %v71 = vsub.s32 0, %v70
    %v72 = vadd.s32 %v67, 1
    %vm73 = vcmp.gt.s32.totalorder %v72, 0
    %v74 = vsel %vm73, %v72, 0
    %v75 = vshrl.u32 %v74, 5
    %v76 = vand.u32 %v74, 31
    %v77 = vsub.s32 32, %v76
    %v78 = vshrl.u32 683565275, %v77
    %v79 = vshll.u32 683565275, %v76
    %v80 = vshrl.u32 2475754826, %v77
    %v81 = vor.u32 %v79, %v80
    %v82 = vshll.u32 2475754826, %v76
    %v83 = vshrl.u32 2131351028, %v77
    %v84 = vor.u32 %v82, %v83
    %v85 = vshll.u32 2131351028, %v76
    %v86 = vshrl.u32 2102212464, %v77
    %v87 = vor.u32 %v85, %v86
    %v88 = vshll.u32 2102212464, %v76
    %v89 = vshrl.u32 920167782, %v77
    %v90 = vor.u32 %v88, %v89
    %v91 = vshll.u32 920167782, %v76
    %v92 = vshrl.u32 1326507024, %v77
    %v93 = vor.u32 %v91, %v92
    %vm94 = vcmp.lt.s32.totalorder %v75, 1
    %vm95 = vcmp.lt.s32.totalorder %v75, 2
    %vm96 = vcmp.lt.s32.totalorder %v75, 3
    %vm97 = vcmp.lt.s32.totalorder %v75, 4
    %v98 = vsel %vm94, %v78, %v81
    %v99 = vsel %vm97, %v87, 2102212464
    %v100 = vsel %vm96, %v84, %v99
    %v101 = vsel %vm95, %v98, %v100
    %v102 = vsel %vm94, %v81, %v84
    %v103 = vsel %vm97, %v90, 920167782
    %v104 = vsel %vm96, %v87, %v103
    %v105 = vsel %vm95, %v102, %v104
    %v106 = vsel %vm94, %v84, %v87
    %v107 = vsel %vm97, %v93, 1326507024
    %v108 = vsel %vm96, %v90, %v107
    %v109 = vsel %vm95, %v106, %v108
    %v110 = vshll.u32 %v70, 8
    %v111 = vmul.u32.u64.compose %v110, %v109
    %v112 = vextract.low.u32 %v111
    %v113 = vextract.high.u32 %v111
    %v114 = vmul.u32.u64.compose %v110, %v105
    %v115 = vextract.low.u32 %v114
    %v116 = vextract.high.u32 %v114
    %v117 = vmul.u32 %v110, %v101
    %v118 = vadd.s32 %v113, %v115
    %vm119 = vc.u32 %v113, %v115
    %v120 = vadd.s32 %v116, 1
    %v121 = vsel %vm119, %v120, %v116
    %v122 = vadd.s32 %v117, %v121
    %v123 = vadd.s32 %v122, 536870912
    %v124 = vshrl.u32 %v123, 30
    %v125 = vshll.u32 %v124, 30
    %v126 = vsub.s32 %v122, %v125
    %vm127 = vcmp.lt.s32.totalorder %v126, 0
    %v128 = vsub.s32 0, %v126
    %v129 = vsel %vm127, %v128, %v126
    %v130 = vclz %v129
    %v131 = vsub.s32 %v130, 2
    %vm132 = vcmp.gt.s32.totalorder 0, %v131
    %v133 = vsel %vm132, 0, %v131
    %v134 = vsub.s32 32, %v133
    %v135 = vshll.u32 %v126, %v133
    %v136 = vshrl.u32 %v118, %v134
    %v137 = vor.u32 %v135, %v136
    %v138 = vsub.s32 4294967266, %v133
    %v139 = vadd.s32 %v138, 127
    %v140 = vshll.u32 %v139, 23
    %v141 = vor.u32 4788187, %v140
    %v142 = vand.u32 2147483647, %v141
    %v144 = vcvt.s32.f32 %v137
    %v145 = vmul.f32 %v144, %v142
    %v146 = vxor.u32 %v145, 2147483648
    %v147 = vsel %vm64, %v146, %v145
    %v148 = vsub.s32 4, %v124
    %v149 = vsel %vm64, %v148, %v124
    %v150 = vsel %vm63, %v60, %v147
    %v151 = vsel %vm63, 0, %v149
    %v152 = vcosq.f32.pop %v150
    %v153 = vsinq.f32.pop %v150
    %vm154 = vweird.f32 %v60
    %v155 = vand.u32 %v151, 3
    %vm156 = vcmp.lt.s32.totalorder %v155, 2
    %vm157 = vcmp.eq.s32.totalorder %v155, 0
    %v158 = vxor.u32 %v153, 2147483648
    %v159 = vsel %vm157, %v152, %v158
    %vm160 = vcmp.eq.s32.totalorder %v155, 2
    %v161 = vxor.u32 %v152, 2147483648
    %v162 = vsel %vm160, %v161, %v153
    %v163 = vsel %vm156, %v159, %v162
    %v164 = vsel %vm154, nan, %v163
    %v165 = vand.u32 2147483647, %v61
    %vm166 = vcmp.le.f32.partialorder %v165, 0.7853982
    %vm167 = vcmp.lt.s32.totalorder %v61, 0
    %v168 = vand.u32 %v61, 2139095040
    %v169 = vshrl.u32 %v168, 23
    %v170 = vsub.s32 %v169, 127
    %v171 = vand.u32 2147483647, %v61
    %v172 = vand.u32 %v171, 8388607
    %v173 = vor.u32 %v172, 8388608
    %v174 = vsub.s32 0, %v173
    %v175 = vadd.s32 %v170, 1
    %vm176 = vcmp.gt.s32.totalorder %v175, 0
    %v177 = vsel %vm176, %v175, 0
    %v178 = vshrl.u32 %v177, 5
    %v179 = vand.u32 %v177, 31
    %v180 = vsub.s32 32, %v179
    %v181 = vshrl.u32 683565275, %v180
    %v182 = vshll.u32 683565275, %v179
    %v183 = vshrl.u32 2475754826, %v180
    %v184 = vor.u32 %v182, %v183
    %v185 = vshll.u32 2475754826, %v179
    %v186 = vshrl.u32 2131351028, %v180
    %v187 = vor.u32 %v185, %v186
    %v188 = vshll.u32 2131351028, %v179
    %v189 = vshrl.u32 2102212464, %v180
    %v190 = vor.u32 %v188, %v189
    %v191 = vshll.u32 2102212464, %v179
    %v192 = vshrl.u32 920167782, %v180
    %v193 = vor.u32 %v191, %v192
    %v194 = vshll.u32 920167782, %v179
    %v195 = vshrl.u32 1326507024, %v180
    %v196 = vor.u32 %v194, %v195
    %vm197 = vcmp.lt.s32.totalorder %v178, 1
    %vm198 = vcmp.lt.s32.totalorder %v178, 2
    %vm199 = vcmp.lt.s32.totalorder %v178, 3
    %vm200 = vcmp.lt.s32.totalorder %v178, 4
    %v201 = vsel %vm197, %v181, %v184
    %v202 = vsel %vm200, %v190, 2102212464
    %v203 = vsel %vm199, %v187, %v202
    %v204 = vsel %vm198, %v201, %v203
    %v205 = vsel %vm197, %v184, %v187
    %v206 = vsel %vm200, %v193, 920167782
    %v207 = vsel %vm199, %v190, %v206
    %v208 = vsel %vm198, %v205, %v207
    %v209 = vsel %vm197, %v187, %v190
    %v210 = vsel %vm200, %v196, 1326507024
    %v211 = vsel %vm199, %v193, %v210
    %v212 = vsel %vm198, %v209, %v211
    %v213 = vshll.u32 %v173, 8
    %v214 = vmul.u32.u64.compose %v213, %v212
    %v215 = vextract.low.u32 %v214
    %v216 = vextract.high.u32 %v214
    %v217 = vmul.u32.u64.compose %v213, %v208
    %v218 = vextract.low.u32 %v217
    %v219 = vextract.high.u32 %v217
    %v220 = vmul.u32 %v213, %v204
    %v221 = vadd.s32 %v216, %v218
    %vm222 = vc.u32 %v216, %v218
    %v223 = vadd.s32 %v219, 1
    %v224 = vsel %vm222, %v223, %v219
    %v225 = vadd.s32 %v220, %v224
    %v226 = vadd.s32 %v225, 536870912
    %v227 = vshrl.u32 %v226, 30
    %v228 = vshll.u32 %v227, 30
    %v229 = vsub.s32 %v225, %v228
    %vm230 = vcmp.lt.s32.totalorder %v229, 0
    %v231 = vsub.s32 0, %v229
    %v232 = vsel %vm230, %v231, %v229
    %v233 = vclz %v232
    %v234 = vsub.s32 %v233, 2
    %vm235 = vcmp.gt.s32.totalorder 0, %v234
    %v236 = vsel %vm235, 0, %v234
    %v237 = vsub.s32 32, %v236
    %v238 = vshll.u32 %v229, %v236
    %v239 = vshrl.u32 %v221, %v237
    %v240 = vor.u32 %v238, %v239
    %v241 = vsub.s32 4294967266, %v236
    %v242 = vadd.s32 %v241, 127
    %v243 = vshll.u32 %v242, 23
    %v244 = vor.u32 4788187, %v243
    %v245 = vand.u32 2147483647, %v244
    %v247 = vcvt.s32.f32 %v240
    %v248 = vmul.f32 %v247, %v245
    %v249 = vxor.u32 %v248, 2147483648
    %v250 = vsel %vm167, %v249, %v248
    %v251 = vsub.s32 4, %v227
    %v252 = vsel %vm167, %v251, %v227
    %v253 = vsel %vm166, %v61, %v250
    %v254 = vsel %vm166, 0, %v252
    %v255 = vcosq.f32.pop %v253
    %v256 = vsinq.f32.pop %v253
    %vm257 = vweird.f32 %v61
    %v258 = vand.u32 %v254, 3
    %vm259 = vcmp.lt.s32.totalorder %v258, 2
    %vm260 = vcmp.eq.s32.totalorder %v258, 0
    %v261 = vxor.u32 %v256, 2147483648
    %v262 = vsel %vm260, %v255, %v261
    %vm263 = vcmp.eq.s32.totalorder %v258, 2
    %v264 = vxor.u32 %v255, 2147483648
    %v265 = vsel %vm263, %v264, %v256
    %v266 = vsel %vm259, %v262, %v265
    %v267 = vsel %vm257, nan, %v266
    %v268 = vand.u32 2147483647, %v60
    %vm269 = vcmp.le.f32.partialorder %v268, 0.7853982
    %vm270 = vcmp.lt.s32.totalorder %v60, 0
    %v271 = vand.u32 %v60, 2139095040
    %v272 = vshrl.u32 %v271, 23
    %v273 = vsub.s32 %v272, 127
    %v274 = vand.u32 2147483647, %v60
    %v275 = vand.u32 %v274, 8388607
    %v276 = vor.u32 %v275, 8388608
    %v277 = vsub.s32 0, %v276
    %v278 = vadd.s32 %v273, 1
    %vm279 = vcmp.gt.s32.totalorder %v278, 0
    %v280 = vsel %vm279, %v278, 0
    %v281 = vshrl.u32 %v280, 5
    %v282 = vand.u32 %v280, 31
    %v283 = vsub.s32 32, %v282
    %v284 = vshrl.u32 683565275, %v283
    %v285 = vshll.u32 683565275, %v282
    %v286 = vshrl.u32 2475754826, %v283
    %v287 = vor.u32 %v285, %v286
    %v288 = vshll.u32 2475754826, %v282
    %v289 = vshrl.u32 2131351028, %v283
    %v290 = vor.u32 %v288, %v289
    %v291 = vshll.u32 2131351028, %v282
    %v292 = vshrl.u32 2102212464, %v283
    %v293 = vor.u32 %v291, %v292
    %v294 = vshll.u32 2102212464, %v282
    %v295 = vshrl.u32 920167782, %v283
    %v296 = vor.u32 %v294, %v295
    %v297 = vshll.u32 920167782, %v282
    %v298 = vshrl.u32 1326507024, %v283
    %v299 = vor.u32 %v297, %v298
    %vm300 = vcmp.lt.s32.totalorder %v281, 1
    %vm301 = vcmp.lt.s32.totalorder %v281, 2
    %vm302 = vcmp.lt.s32.totalorder %v281, 3
    %vm303 = vcmp.lt.s32.totalorder %v281, 4
    %v304 = vsel %vm300, %v284, %v287
    %v305 = vsel %vm303, %v293, 2102212464
    %v306 = vsel %vm302, %v290, %v305
    %v307 = vsel %vm301, %v304, %v306
    %v308 = vsel %vm300, %v287, %v290
    %v309 = vsel %vm303, %v296, 920167782
    %v310 = vsel %vm302, %v293, %v309
    %v311 = vsel %vm301, %v308, %v310
    %v312 = vsel %vm300, %v290, %v293
    %v313 = vsel %vm303, %v299, 1326507024
    %v314 = vsel %vm302, %v296, %v313
    %v315 = vsel %vm301, %v312, %v314
    %v316 = vshll.u32 %v276, 8
    %v317 = vmul.u32.u64.compose %v316, %v315
    %v318 = vextract.low.u32 %v317
    %v319 = vextract.high.u32 %v317
    %v320 = vmul.u32.u64.compose %v316, %v311
    %v321 = vextract.low.u32 %v320
    %v322 = vextract.high.u32 %v320
    %v323 = vmul.u32 %v316, %v307
    %v324 = vadd.s32 %v319, %v321
    %vm325 = vc.u32 %v319, %v321
    %v326 = vadd.s32 %v322, 1
    %v327 = vsel %vm325, %v326, %v322
    %v328 = vadd.s32 %v323, %v327
    %v329 = vadd.s32 %v328, 536870912
    %v330 = vshrl.u32 %v329, 30
    %v331 = vshll.u32 %v330, 30
    %v332 = vsub.s32 %v328, %v331
    %vm333 = vcmp.lt.s32.totalorder %v332, 0
    %v334 = vsub.s32 0, %v332
    %v335 = vsel %vm333, %v334, %v332
    %v336 = vclz %v335
    %v337 = vsub.s32 %v336, 2
    %vm338 = vcmp.gt.s32.totalorder 0, %v337
    %v339 = vsel %vm338, 0, %v337
    %v340 = vsub.s32 32, %v339
    %v341 = vshll.u32 %v332, %v339
    %v342 = vshrl.u32 %v324, %v340
    %v343 = vor.u32 %v341, %v342
    %v344 = vsub.s32 4294967266, %v339
    %v345 = vadd.s32 %v344, 127
    %v346 = vshll.u32 %v345, 23
    %v347 = vor.u32 4788187, %v346
    %v348 = vand.u32 2147483647, %v347
    %v350 = vcvt.s32.f32 %v343
    %v351 = vmul.f32 %v350, %v348
    %v352 = vxor.u32 %v351, 2147483648
    %v353 = vsel %vm270, %v352, %v351
    %v354 = vsub.s32 4, %v330
    %v355 = vsel %vm270, %v354, %v330
    %v356 = vsel %vm269, %v60, %v353
    %v357 = vsel %vm269, 0, %v355
    %v358 = vcosq.f32.pop %v356
    %v359 = vsinq.f32.pop %v356
    %vm360 = vweird.f32 %v60
    %v361 = vadd.s32 %v357, 3
    %v362 = vand.u32 %v361, 3
    %vm363 = vcmp.lt.s32.totalorder %v362, 2
    %vm364 = vcmp.eq.s32.totalorder %v362, 0
    %v365 = vxor.u32 %v359, 2147483648
    %v366 = vsel %vm364, %v358, %v365
    %vm367 = vcmp.eq.s32.totalorder %v362, 2
    %v368 = vxor.u32 %v358, 2147483648
    %v369 = vsel %vm367, %v368, %v359
    %v370 = vsel %vm363, %v366, %v369
    %v371 = vsel %vm360, nan, %v370
    %v372 = vand.u32 2147483647, %v61
    %vm373 = vcmp.le.f32.partialorder %v372, 0.7853982
    %vm374 = vcmp.lt.s32.totalorder %v61, 0
    %v375 = vand.u32 %v61, 2139095040
    %v376 = vshrl.u32 %v375, 23
    %v377 = vsub.s32 %v376, 127
    %v378 = vand.u32 2147483647, %v61
    %v379 = vand.u32 %v378, 8388607
    %v380 = vor.u32 %v379, 8388608
    %v381 = vsub.s32 0, %v380
    %v382 = vadd.s32 %v377, 1
    %vm383 = vcmp.gt.s32.totalorder %v382, 0
    %v384 = vsel %vm383, %v382, 0
    %v385 = vshrl.u32 %v384, 5
    %v386 = vand.u32 %v384, 31
    %v387 = vsub.s32 32, %v386
    %v388 = vshrl.u32 683565275, %v387
    %v389 = vshll.u32 683565275, %v386
    %v390 = vshrl.u32 2475754826, %v387
    %v391 = vor.u32 %v389, %v390
    %v392 = vshll.u32 2475754826, %v386
    %v393 = vshrl.u32 2131351028, %v387
    %v394 = vor.u32 %v392, %v393
    %v395 = vshll.u32 2131351028, %v386
    %v396 = vshrl.u32 2102212464, %v387
    %v397 = vor.u32 %v395, %v396
    %v398 = vshll.u32 2102212464, %v386
    %v399 = vshrl.u32 920167782, %v387
    %v400 = vor.u32 %v398, %v399
    %v401 = vshll.u32 920167782, %v386
    %v402 = vshrl.u32 1326507024, %v387
    %v403 = vor.u32 %v401, %v402
    %vm404 = vcmp.lt.s32.totalorder %v385, 1
    %vm405 = vcmp.lt.s32.totalorder %v385, 2
    %vm406 = vcmp.lt.s32.totalorder %v385, 3
    %vm407 = vcmp.lt.s32.totalorder %v385, 4
    %v408 = vsel %vm404, %v388, %v391
    %v409 = vsel %vm407, %v397, 2102212464
    %v410 = vsel %vm406, %v394, %v409
    %v411 = vsel %vm405, %v408, %v410
    %v412 = vsel %vm404, %v391, %v394
    %v413 = vsel %vm407, %v400, 920167782
    %v414 = vsel %vm406, %v397, %v413
    %v415 = vsel %vm405, %v412, %v414
    %v416 = vsel %vm404, %v394, %v397
    %v417 = vsel %vm407, %v403, 1326507024
    %v418 = vsel %vm406, %v400, %v417
    %v419 = vsel %vm405, %v416, %v418
    %v420 = vshll.u32 %v380, 8
    %v421 = vmul.u32.u64.compose %v420, %v419
    %v422 = vextract.low.u32 %v421
    %v423 = vextract.high.u32 %v421
    %v424 = vmul.u32.u64.compose %v420, %v415
    %v425 = vextract.low.u32 %v424
    %v426 = vextract.high.u32 %v424
    %v427 = vmul.u32 %v420, %v411
    %v428 = vadd.s32 %v423, %v425
    %vm429 = vc.u32 %v423, %v425
    %v430 = vadd.s32 %v426, 1
    %v431 = vsel %vm429, %v430, %v426
    %v432 = vadd.s32 %v427, %v431
    %v433 = vadd.s32 %v432, 536870912
    %v434 = vshrl.u32 %v433, 30
    %v435 = vshll.u32 %v434, 30
    %v436 = vsub.s32 %v432, %v435
    %vm437 = vcmp.lt.s32.totalorder %v436, 0
    %v438 = vsub.s32 0, %v436
    %v439 = vsel %vm437, %v438, %v436
    %v440 = vclz %v439
    %v441 = vsub.s32 %v440, 2
    %vm442 = vcmp.gt.s32.totalorder 0, %v441
    %v443 = vsel %vm442, 0, %v441
    %v444 = vsub.s32 32, %v443
    %v445 = vshll.u32 %v436, %v443
    %v446 = vshrl.u32 %v428, %v444
    %v447 = vor.u32 %v445, %v446
    %v448 = vsub.s32 4294967266, %v443
    %v449 = vadd.s32 %v448, 127
    %v450 = vshll.u32 %v449, 23
    %v451 = vor.u32 4788187, %v450
    %v452 = vand.u32 2147483647, %v451
    %v454 = vcvt.s32.f32 %v447
    %v455 = vmul.f32 %v454, %v452
    %v456 = vxor.u32 %v455, 2147483648
    %v457 = vsel %vm374, %v456, %v455
    %v458 = vsub.s32 4, %v434
    %v459 = vsel %vm374, %v458, %v434
    %v460 = vsel %vm373, %v61, %v457
    %v461 = vsel %vm373, 0, %v459
    %v462 = vcosq.f32.pop %v460
    %v463 = vsinq.f32.pop %v460
    %vm464 = vweird.f32 %v61
    %v465 = vadd.s32 %v461, 3
    %v466 = vand.u32 %v465, 3
    %vm467 = vcmp.lt.s32.totalorder %v466, 2
    %vm468 = vcmp.eq.s32.totalorder %v466, 0
    %v469 = vxor.u32 %v463, 2147483648
    %v470 = vsel %vm468, %v462, %v469
    %vm471 = vcmp.eq.s32.totalorder %v466, 2
    %v472 = vxor.u32 %v462, 2147483648
    %v473 = vsel %vm471, %v472, %v463
    %v474 = vsel %vm467, %v470, %v473
    %v475 = vsel %vm464, nan, %v474
    %476 = vst [vmem:[#allocation2] sm:$0xff] %v164
    %477 = vst [vmem:[#allocation2 + $0x8] sm:$0xff] %v267
    %478 = vst [vmem:[#allocation4] sm:$0xff] %v371
    %479 = vst [vmem:[#allocation4 + $0x8] sm:$0xff] %v475
    // Predicated region
    $region10: #{tpu_custom_call.1} parent=1 // pred_check
      _
    $region11: #{tpu_custom_call.1} parent=1 // pred_check_branch
      %481 = sbr.rel (0) target = $region13
    $region12: #{tpu_custom_call.1} parent=1 // pred_region
      %s483 = ssub.s32 256, 256
      %484 = vsyncadd [#allocation3], %s483
      %s486 = sshll.u32 [#allocation2], 4
      %s487 = int_to_ptr.vmem [resolvable:$true] %s486
      %489 = dma.vmem_to_hbm [thread:$0]  %s487, 256, %s2, [#allocation3]
    $region13: #{tpu_custom_call.1} parent=1 // pred_fallthru
      _
    // Predicated region
    $region14: #{tpu_custom_call.1} parent=1 // pred_check
      _
    $region15: #{tpu_custom_call.1} parent=1 // pred_check_branch
      %491 = sbr.rel (0) target = $region17
    $region16: #{tpu_custom_call.1} parent=1 // pred_region
      %s493 = ssub.s32 256, 256
      %494 = vsyncadd [#allocation5], %s493
      %s496 = sshll.u32 [#allocation4], 4
      %s497 = int_to_ptr.vmem [resolvable:$true] %s496
      %499 = dma.vmem_to_hbm [thread:$0]  %s497, 256, %s3, [#allocation5]
    $region17: #{tpu_custom_call.1} parent=1 // pred_fallthru
      _
    // Predicated region
    $region18: #{tpu_custom_call.1} parent=1 // pred_check
      _
    $region19: #{tpu_custom_call.1} parent=1 // pred_check_branch
      %501 = sbr.rel (0) target = $region21
    $region20: #{tpu_custom_call.1} parent=1 // pred_region
      %502 = dma.done [#allocation3], 256
    $region21: #{tpu_custom_call.1} parent=1 // pred_fallthru
      _
    // Predicated region
    $region22: #{tpu_custom_call.1} parent=1 // pred_check
      _
    $region23: #{tpu_custom_call.1} parent=1 // pred_check_branch
      %504 = sbr.rel (0) target = $region25
    $region24: #{tpu_custom_call.1} parent=1 // pred_region
      %505 = dma.done [#allocation5], 256
    $region25: #{tpu_custom_call.1} parent=1 // pred_fallthru
      _
    %506 = vsyncpa [#allocation3], 1
    %507 = vsyncpa [#allocation5], 1

</llo_original>
